<compile_context>
chip_gen: v7x
topology: tpu7x:2x2x1
jax: 0.10.0
libtpu: 0.0.40
codegen_flags: <defaults>
</compile_context>

<pallas_src>
import math

import jax
import jax.numpy as jnp
from jax.experimental import pallas as pl
from jax.experimental.pallas import tpu as pltpu


def _copy_kernel(x_ref, o_ref):
    # Straight copy of the current (tile_rows, L) block.
    o_ref[...] = x_ref[...]


def unflatten(x, new_shape, *, max_block_bytes=2 * 1024 * 1024):
    """Pallas equivalent of `x.view(-1, *new_shape)`.

    x can be any shape whose total size is divisible by prod(new_shape).
    Returns an array of shape (-1, *new_shape) with identical element order
    and dtype.  The data movement (a deliberate materializing copy) is done
    by a tiled Pallas kernel over a contiguous (rows, L) slab.
    """
    feat = int(math.prod(new_shape))
    total = int(math.prod(x.shape))
    assert total % feat == 0, "input size must be divisible by prod(new_shape)"
    n = total // feat

    # ---- Pick a copy-optimal slab width L (large multiple of 128 dividing total).
    L = None
    for cand in (8192, 4096, 2048, 1024, 512, 256, 128):
        if total % cand == 0:
            L = cand
            break

    if L is None:
        # Total size is not a multiple of 128 lanes: a Pallas copy would need
        # masked partial stores and adds nothing over the metadata-only reshape.
        return jnp.reshape(x, (n, *new_shape))

    rows = total // L
    dtype_bytes = jnp.dtype(x.dtype).itemsize
    row_bytes = L * dtype_bytes

    # Sublane packing multiple: 8 for f32, 16 for bf16, 32 for int8/fp8.
    sub = max(8, 32 // dtype_bytes)

    # Bound tile_rows so each block stays under max_block_bytes (VMEM budget
    # independent of batch size; safe on v5e 16 MiB scoped / v7x 64 MiB phys).
    budget_rows = max(1, max_block_bytes // row_bytes)
    if budget_rows >= rows:
        tile_rows = rows                      # full dim -> always a legal block
    else:
        tile_rows = max(sub, (budget_rows // sub) * sub)
        tile_rows = min(tile_rows, rows)

    num_blocks = pl.cdiv(rows, tile_rows)

    # Glue: present the data as a contiguous (rows, L) slab (row-major, same
    # element order as torch .view). Metadata-only.
    x2d = jnp.reshape(x, (rows, L))

    out2d = pl.pallas_call(
        _copy_kernel,
        out_shape=jax.ShapeDtypeStruct((rows, L), x.dtype),
        grid_spec=pltpu.PrefetchScalarGridSpec(
            num_scalar_prefetch=0,
            grid=(num_blocks,),
            in_specs=[pl.BlockSpec((tile_rows, L), lambda i: (i, 0))],
            out_specs=pl.BlockSpec((tile_rows, L), lambda i: (i, 0)),
        ),
        compiler_params=pltpu.CompilerParams(
            # Row axis is independent -> shard across v7x's 2 TensorCores;
            # a no-op on single-TC v5e/v6e.
            dimension_semantics=("parallel",),
        ),
    )(x2d)

    # Glue: final unflatten to (-1, *new_shape) — metadata only.
    return jnp.reshape(out2d, (n, *new_shape))


if __name__ == "__main__":
    key = jax.random.PRNGKey(0)
    k0, k1, k2 = jax.random.split(key, 3)

    # --- Main case: typical conv-decoder use — unflatten a (B, C*H*W) latent
    #     back to NCHW feature maps.
    B, C, H, W = 2, 4, 16, 16
    new_shape = (C, H, W)
    x = jax.random.normal(k0, (B, C * H * W), dtype=jnp.float32)

    y = unflatten(x, new_shape)
    y = jax.block_until_ready(y)

    ref = jnp.reshape(x, (-1, *new_shape))
    assert y.shape == (B, C, H, W), y.shape
    assert y.dtype == x.dtype
    assert bool(jnp.array_equal(y, ref))

    # --- Multi-block path: force several grid steps by shrinking the per-block
    #     budget (exercises row-tiling + bounded VMEM).
    x2 = jax.random.normal(k1, (128, 1024), dtype=jnp.float32)  # total = 131072
    y2 = unflatten(x2, (4, 16, 16), max_block_bytes=256 * 1024)
    y2 = jax.block_until_ready(y2)
    ref2 = jnp.reshape(x2, (-1, 4, 16, 16))
    assert y2.shape == ref2.shape
    assert bool(jnp.array_equal(y2, ref2))

    # --- Fallback path: total not a multiple of 128 lanes -> metadata-only
    #     reshape (no masked-store Pallas copy).
    x3 = jax.random.normal(k2, (2, 3 * 5 * 7), dtype=jnp.float32)
    y3 = unflatten(x3, (3, 5, 7))
    y3 = jax.block_until_ready(y3)
    ref3 = jnp.reshape(x3, (-1, 3, 5, 7))
    assert y3.shape == ref3.shape
    assert bool(jnp.array_equal(y3, ref3))

    print("KERNEL_OK")
</pallas_src>

<mosaic_0001>
module attributes {stable_mosaic.version = 11 : i64} {
  func.func @_copy_kernel(%arg0: i32, %arg1: memref<1x2048xf32, #tpu.memory_space<vmem>>, %arg2: memref<1x2048xf32, #tpu.memory_space<vmem>>) attributes {dimension_semantics = [#tpu.dimension_semantics<parallel>], iteration_bounds = array<i64: 1>, scalar_prefetch = 0 : i64, scratch_operands = 0 : i64, tpu.core_type = #tpu.core_type<tc>, window_params = [{transform_indices = @transform_0, window_bounds = array<i64: 1, 2048>}, {transform_indices = @transform_1, window_bounds = array<i64: 1, 2048>}]} {
    %c0 = arith.constant 0 : index
    %c0_0 = arith.constant 0 : index
    %0 = vector.load %arg1[%c0, %c0_0] : memref<1x2048xf32, #tpu.memory_space<vmem>>, vector<1x2048xf32>
    %c0_1 = arith.constant 0 : index
    %c0_2 = arith.constant 0 : index
    %1 = vector.load %arg2[%c0_1, %c0_2] : memref<1x2048xf32, #tpu.memory_space<vmem>>, vector<1x2048xf32>
    tpu.vector_store %arg2[%c0_1, %c0_2], %0 {strides = array<i32>} : memref<1x2048xf32, #tpu.memory_space<vmem>>, vector<1x2048xf32>,
    return
  }
  func.func @transform_0(%arg0: i32) -> (i32, i32) {
    %c0_i32 = arith.constant 0 : i32
    %c0_i32_0 = arith.constant 0 : i32
    return %arg0, %c0_i32 : i32, i32
  }
  func.func @transform_1(%arg0: i32) -> (i32, i32) {
    %c0_i32 = arith.constant 0 : i32
    %c0_i32_0 = arith.constant 0 : i32
    return %arg0, %c0_i32 : i32, i32
  }
}

</mosaic_0001>

<llo_original>
// kernel: tpu_custom_call.1
$region0: #{tpu_custom_call.1}
  #allocation0 [shape = 'u32[]', space=smem, size = 0x4, offset = 0x4, fixed_abs, tag = 'smem constant byte address 0x4 - core index']
  #allocation1 [shape = 'u32[144,128]{1,0:T(1,128)}', space=vmem, size = 0x12000, scoped, tag = 'internal scratch']
  %s0 = inlined_call_operand.hbm [shape: f32[1,2048], index: 0, kind: input, shape index: {}]
  %s1 = inlined_call_operand.hbm [shape: f32[1,2048], index: 1, kind: output, shape index: {}]
  %s2 = sld [smem:[#allocation0]]
  $region18: #{tpu_custom_call.1} parent=0
    _
  %s4 = ssub.s32 1, %s2
  %s5 = scalar_select 0, %s4, %s2
  $region1: #{tpu_custom_call.1} parent=0
    #allocation2 [shape = 'u8[8192]{0}', space=vmem, size = 0x2000, scoped, tag = 'input window, operand 0, single buffered']
    #allocation3 [shape = 's32[1]{0}', space=sflag, size = 0x4, scoped, tag = 'scoped memory for tpu_custom_call.1']
    #allocation4 [shape = 's32[1]{0}', space=sflag, size = 0x4, scoped, tag = 'scoped memory for tpu_custom_call.1']
    #allocation5 [shape = 'u8[8192]{0}', space=vmem, size = 0x2000, scoped, tag = 'output window, operand 0, single buffered']
    %6 = vsyncpa [#allocation3], 0
    %7 = vsyncpa [#allocation4], 0
    // Predicated region
    $region2: #{tpu_custom_call.1} parent=1 // pred_check
      _
    $region3: #{tpu_custom_call.1} parent=1 // pred_check_branch
      %9 = sbr.rel (0) target = $region5
    $region4: #{tpu_custom_call.1} parent=1 // pred_region
      %s11 = ssub.s32 256, 256
      %12 = vsyncadd [#allocation3], %s11
      %s14 = sshll.u32 [#allocation2], 4
      %s15 = int_to_ptr.vmem [resolvable:$true] %s14
      %17 = dma.hbm_to_vmem [thread:$0]  %s0, 256, %s15, [#allocation3]
    $region5: #{tpu_custom_call.1} parent=1 // pred_fallthru
      _
    // Predicated region
    $region6: #{tpu_custom_call.1} parent=1 // pred_check
      _
    $region7: #{tpu_custom_call.1} parent=1 // pred_check_branch
      %19 = sbr.rel (0) target = $region9
    $region8: #{tpu_custom_call.1} parent=1 // pred_region
      %20 = dma.done [#allocation3], 256
    $region9: #{tpu_custom_call.1} parent=1 // pred_fallthru
      _
    %v21 = vld [vmem:[#allocation2] sm:$0xff]
    %v22 = vld [vmem:[#allocation2 + $0x8] sm:$0xff]
    %23 = vst [vmem:[#allocation5] sm:$0xff] %v21
    %24 = vst [vmem:[#allocation5 + $0x8] sm:$0xff] %v22
    // Predicated region
    $region10: #{tpu_custom_call.1} parent=1 // pred_check
      _
    $region11: #{tpu_custom_call.1} parent=1 // pred_check_branch
      %26 = sbr.rel (0) target = $region13
    $region12: #{tpu_custom_call.1} parent=1 // pred_region
      %s28 = ssub.s32 256, 256
      %29 = vsyncadd [#allocation4], %s28
      %s31 = sshll.u32 [#allocation5], 4
      %s32 = int_to_ptr.vmem [resolvable:$true] %s31
      %34 = dma.vmem_to_hbm [thread:$0]  %s32, 256, %s1, [#allocation4]
    $region13: #{tpu_custom_call.1} parent=1 // pred_fallthru
      _
    // Predicated region
    $region14: #{tpu_custom_call.1} parent=1 // pred_check
      _
    $region15: #{tpu_custom_call.1} parent=1 // pred_check_branch
      %36 = sbr.rel (0) target = $region17
    $region16: #{tpu_custom_call.1} parent=1 // pred_region
      %37 = dma.done [#allocation4], 256
    $region17: #{tpu_custom_call.1} parent=1 // pred_fallthru
      _
    %38 = vsyncpa [#allocation3], 1
    %39 = vsyncpa [#allocation4], 1

</llo_original>
